<compile_context>
chip_gen: v5e
topology: v5e:2x2
jax: 0.10.0
libtpu: 0.0.40
codegen_flags: <defaults>
</compile_context>

<pallas_src>
import functools

import jax
import jax.numpy as jnp
from jax.experimental import pallas as pl
from jax.experimental.pallas import tpu as pltpu

LANES = 128
SUBLANES = 8
_TARGET_BLOCK_ROWS = 2048          # 2048 * 128 * 4 B = 1 MiB per f32 tile
_FUSE_MAX_ELEMS = 256 * 1024       # fuse both passes when f32 slab <= 1 MiB


def _cdiv(a, b):
    return -(-a // b)


def _round_up(a, b):
    return _cdiv(a, b) * b


def _choose_block_rows(rows):
    for b in (_TARGET_BLOCK_ROWS, 1024, 512, 256, 128, 64, 32, 16, 8):
        if rows % b == 0:
            return b
    return SUBLANES


def _as_slab(x):
    """Flatten x to a lane-dense (rows, 128) slab; rows is a multiple of 8."""
    numel = x.size
    rows = _round_up(_cdiv(numel, LANES), SUBLANES)
    pad = rows * LANES - numel
    flat = x.reshape(-1)
    if pad:
        # TODO(synk): mask the ragged tail in-kernel (broadcasted_iota vs numel)
        # to avoid this whole-array pad copy for sizes not divisible by 1024.
        flat = jnp.pad(flat, (0, pad))  # zeros don't perturb sum of squares
    return flat.reshape(rows, LANES), pad


def _fused_kernel(ema_ref, x_ref, y_ref, ema_out_ref, *, beta, inv_numel):
    """Single pass: sumsq -> EMA update -> rsqrt -> scale; x resident in VMEM."""
    xf = x_ref[...].astype(jnp.float32)
    # VPU accumulation onto one (8, 128) vreg, then a single cross-lane reduce.
    part = jnp.sum((xf * xf).reshape(-1, SUBLANES, LANES), axis=0)
    cur = jnp.sum(part, axis=(0, 1), keepdims=True) * inv_numel        # (1, 1)
    new_ema = cur + beta * (ema_ref[0] - cur)       # torch: cur.lerp(ema, beta)
    gain = jax.lax.rsqrt(new_ema)                                      # (1, 1)
    y_ref[...] = (xf * gain).astype(y_ref.dtype)
    ema_out_ref[...] = new_ema


def _sumsq_partials_kernel(x_ref, part_ref):
    """Per-block (8,128) partial sum of squares; pure VPU in the hot loop."""
    xf = x_ref[...].astype(jnp.float32)
    part_ref[...] = jnp.sum((xf * xf).reshape(-1, SUBLANES, LANES), axis=0)


def _scale_kernel(gain_ref, x_ref, y_ref):
    """y = x * gain (scalar gain lives in SMEM)."""
    g = gain_ref[0]
    y_ref[...] = (x_ref[...].astype(jnp.float32) * g).astype(y_ref.dtype)


def _scale_pass(x2d, gain, out_dtype, block_rows):
    rows = x2d.shape[0]
    num_blocks = rows // block_rows
    gain_arr = gain.reshape(1).astype(jnp.float32)
    return pl.pallas_call(
        _scale_kernel,
        out_shape=jax.ShapeDtypeStruct(x2d.shape, out_dtype),
        grid_spec=pltpu.PrefetchScalarGridSpec(
            num_scalar_prefetch=0,
            grid=(num_blocks,),
            in_specs=[
                pl.BlockSpec(memory_space=pltpu.MemorySpace.SMEM),     # gain
                pl.BlockSpec((block_rows, LANES), lambda i: (i, 0)),   # x tile
            ],
            out_specs=pl.BlockSpec((block_rows, LANES), lambda i: (i, 0)),
        ),
        compiler_params=pltpu.CompilerParams(
            dimension_semantics=("parallel",)),
    )(gain_arr, x2d)


@functools.partial(jax.jit, static_argnames=("beta", "training"))
def ema_norm(x, magnitude_ema, *, beta, training=True):
    """Functional EMANorm.forward. Returns (y, new_magnitude_ema)."""
    orig_shape = x.shape
    orig_dtype = x.dtype
    numel = x.size

    x2d, pad = _as_slab(x)
    rows = x2d.shape[0]

    def _unslab(y2d):
        if pad:
            return y2d.reshape(-1)[:numel].reshape(orig_shape)
        return y2d.reshape(orig_shape)

    # ---------------- fused single-pass path (small tensors) ----------------
    if training and numel <= _FUSE_MAX_ELEMS:
        y2d, ema_out = pl.pallas_call(
            functools.partial(_fused_kernel, beta=float(beta),
                              inv_numel=1.0 / float(numel)),
            out_shape=(jax.ShapeDtypeStruct(x2d.shape, orig_dtype),
                       jax.ShapeDtypeStruct((1, 1), jnp.float32)),
            in_specs=[
                pl.BlockSpec(memory_space=pltpu.MemorySpace.SMEM),   # ema scalar
                pl.BlockSpec(memory_space=pltpu.MemorySpace.VMEM),   # x slab
            ],
            out_specs=(
                pl.BlockSpec(memory_space=pltpu.MemorySpace.VMEM),   # y slab
                pl.BlockSpec(memory_space=pltpu.MemorySpace.VMEM),   # new ema
            ),
        )(magnitude_ema.astype(jnp.float32).reshape(1), x2d)
        return _unslab(y2d), ema_out[0, 0]

    # ---------------- two-pass path (large tensors / eval) ------------------
    block_rows = _choose_block_rows(rows)
    num_blocks = rows // block_rows

    if training:
        # Pass 1: per-block (8,128) partial sums ("parallel" grid -> shards
        # across both TensorCores on v7x; identical result on single-TC chips).
        partials = pl.pallas_call(
            _sumsq_partials_kernel,
            out_shape=jax.ShapeDtypeStruct((num_blocks * SUBLANES, LANES),
                                           jnp.float32),
            grid_spec=pltpu.PrefetchScalarGridSpec(
                num_scalar_prefetch=0,
                grid=(num_blocks,),
                in_specs=[pl.BlockSpec((block_rows, LANES), lambda i: (i, 0))],
                out_specs=pl.BlockSpec((SUBLANES, LANES), lambda i: (i, 0)),
            ),
            compiler_params=pltpu.CompilerParams(
                dimension_semantics=("parallel",)),
        )(x2d)
        cur = jnp.sum(partials) / jnp.float32(numel)
        ema_f32 = magnitude_ema.astype(jnp.float32)
        new_ema = cur + beta * (ema_f32 - cur)       # torch: cur.lerp(ema, beta)
    else:
        new_ema = magnitude_ema                      # buffer untouched in eval

    gain = jax.lax.rsqrt(new_ema.astype(jnp.float32))
    y2d = _scale_pass(x2d, gain, orig_dtype, block_rows)
    return _unslab(y2d), new_ema


if __name__ == "__main__":
    key = jax.random.PRNGKey(0)
    k_small, k_large = jax.random.split(key)
    beta = 0.99
    # buffer init from __init__: torch.ones([])
    magnitude_ema = jnp.ones((), dtype=jnp.float32)

    # --- small NCHW activation: exercises the fused single-pass path -------
    x = jax.random.normal(k_small, (2, 4, 16, 16), dtype=jnp.float32)
    y, new_ema = ema_norm(x, magnitude_ema, beta=beta, training=True)
    jax.block_until_ready((y, new_ema))

    cur = jnp.mean(jnp.square(x.astype(jnp.float32)))
    ref_ema = cur + beta * (magnitude_ema - cur)
    ref_y = x * jax.lax.rsqrt(ref_ema)
    assert jnp.allclose(new_ema, ref_ema, rtol=1e-5, atol=1e-6), (new_ema, ref_ema)
    assert jnp.allclose(y, ref_y, rtol=1e-5, atol=1e-6)

    # --- eval mode: scale-only path, buffer untouched -----------------------
    y_eval, ema_eval = ema_norm(x, magnitude_ema, beta=beta, training=False)
    jax.block_until_ready((y_eval, ema_eval))
    assert jnp.allclose(y_eval, x * jax.lax.rsqrt(magnitude_ema),
                        rtol=1e-5, atol=1e-6)
    assert jnp.allclose(ema_eval, magnitude_ema)

    # --- larger activation: exercises the two-pass tiled path ---------------
    x_big = jax.random.normal(k_large, (8, 32, 64, 64), dtype=jnp.float32)
    y_big, ema_big = ema_norm(x_big, magnitude_ema, beta=beta, training=True)
    jax.block_until_ready((y_big, ema_big))

    cur_b = jnp.mean(jnp.square(x_big.astype(jnp.float32)))
    ref_ema_b = cur_b + beta * (magnitude_ema - cur_b)
    ref_y_b = x_big * jax.lax.rsqrt(ref_ema_b)
    assert jnp.allclose(ema_big, ref_ema_b, rtol=1e-5, atol=1e-6), (ema_big, ref_ema_b)
    assert jnp.allclose(y_big, ref_y_b, rtol=1e-5, atol=1e-6)

    print("KERNEL_OK")
</pallas_src>

<mosaic_0001>
module attributes {stable_mosaic.version = 11 : i64} {
  func.func @_fused_kernel(%arg0: memref<1xf32, #tpu.memory_space<smem>>, %arg1: memref<16x128xf32, #tpu.memory_space<vmem>>, %arg2: memref<16x128xf32, #tpu.memory_space<vmem>>, %arg3: memref<1x1xf32, #tpu.memory_space<vmem>>) attributes {dimension_semantics = [], scalar_prefetch = 0 : i64, scratch_operands = 0 : i64, tpu.core_type = #tpu.core_type<tc>} {
    %c0 = arith.constant 0 : index
    %c0_0 = arith.constant 0 : index
    %0 = vector.load %arg1[%c0, %c0_0] : memref<16x128xf32, #tpu.memory_space<vmem>>, vector<16x128xf32>
    %1 = arith.mulf %0, %0 : vector<16x128xf32>
    %2 = vector.shape_cast %1 : vector<16x128xf32> to vector<2x8x128xf32>
    %cst = arith.constant dense<0.000000e+00> : vector<8x128xf32>
    %3 = vector.multi_reduction <add>, %2, %cst [0] : vector<2x8x128xf32> to vector<8x128xf32>
    %4 = vector.shape_cast %3 : vector<8x128xf32> to vector<1x8x128xf32>
    %cst_1 = arith.constant dense<0.000000e+00> : vector<1xf32>
    %5 = vector.multi_reduction <add>, %4, %cst_1 [1, 2] : vector<1x8x128xf32> to vector<1xf32>
    %6 = vector.shape_cast %5 : vector<1xf32> to vector<1x1x1xf32>
    %7 = vector.extract %6[0, 0, 0] : f32 from vector<1x1x1xf32>
    %8 = vector.broadcast %7 : f32 to vector<1x1xf32>
    %cst_2 = arith.constant 4.8828125E-4 : f32
    %9 = vector.broadcast %cst_2 : f32 to vector<1x1xf32>
    %10 = arith.mulf %8, %9 : vector<1x1xf32>
    %c0_3 = arith.constant 0 : index
    %11 = memref.load %arg0[%c0_3] : memref<1xf32, #tpu.memory_space<smem>>
    %12 = vector.broadcast %11 : f32 to vector<1x1xf32>
    %13 = arith.subf %12, %10 : vector<1x1xf32>
    %cst_4 = arith.constant 9.900000e-01 : f32
    %14 = vector.broadcast %cst_4 : f32 to vector<1x1xf32>
    %15 = arith.mulf %14, %13 : vector<1x1xf32>
    %16 = arith.addf %10, %15 : vector<1x1xf32>
    %17 = math.rsqrt %16 : vector<1x1xf32>
    %18 = vector.broadcast %17 : vector<1x1xf32> to vector<16x128xf32>
    %19 = arith.mulf %0, %18 : vector<16x128xf32>
    %c0_5 = arith.constant 0 : index
    %c0_6 = arith.constant 0 : index
    %20 = vector.load %arg2[%c0_5, %c0_6] : memref<16x128xf32, #tpu.memory_space<vmem>>, vector<16x128xf32>
    tpu.vector_store %arg2[%c0_5, %c0_6], %19 {strides = array<i32>} : memref<16x128xf32, #tpu.memory_space<vmem>>, vector<16x128xf32>,
    %c0_7 = arith.constant 0 : index
    %c0_8 = arith.constant 0 : index
    %21 = vector.load %arg3[%c0_7, %c0_8] : memref<1x1xf32, #tpu.memory_space<vmem>>, vector<1x1xf32>
    tpu.vector_store %arg3[%c0_7, %c0_8], %16 {strides = array<i32>} : memref<1x1xf32, #tpu.memory_space<vmem>>, vector<1x1xf32>,
    return
  }
}

</mosaic_0001>

<llo_original>
// kernel: ema_norm.1
$region0: #{ema_norm.1}
  #allocation0 [shape = 'u32[]', space=smem, size = 0x4, offset = 0x4, fixed_abs, tag = 'smem constant byte address 0x4 - core index']
  #allocation1 [shape = 'u32[72,128]{1,0:T(1,128)}', space=vmem, size = 0x9000, scoped, tag = 'internal scratch']
  #allocation2 [shape = 'f32[1]{0:T(128)S(6)}', space=smem, size = 0x200, scoped, tag = 'scoped memory for ema_norm.1']
  %s0 = inlined_call_operand.<no memory space> [shape: f32[1], index: 0, kind: input, shape index: {}]
  %s1 = inlined_call_operand.vmem [shape: f32[16,128], index: 1, kind: input, shape index: {}]
  %s2 = inlined_call_operand.vmem [shape: f32[16,128], index: 2, kind: output, shape index: {0}]
  %s3 = inlined_call_operand.hbm [shape: f32[1,1], index: 3, kind: output, shape index: {1}]
  %4 = xla_tuple %s2, %s3
  %s5 = sld [smem:[#allocation0]]
  $region26: #{ema_norm.1} parent=0
    _
  %s7 = ssub.s32 1, %s5
  %s8 = scalar_select 0, %s7, %s5
  %9 = sst [smem:[#allocation2]] %s0
  $region1: #{ema_norm.1} parent=0
    #allocation3 [shape = 'u8[512]{0}', space=vmem, size = 0x400, scoped, tag = 'output window, operand 1, single buffered']
    #allocation4 [shape = 's32[1]{0}', space=sflag, size = 0x4, scoped, tag = 'scoped memory for ema_norm.1']
    %10 = vsyncpa [#allocation4], 0
    // Predicated region
    $region2: #{ema_norm.1} parent=1 // pred_check
      _
    $region3: #{ema_norm.1} parent=1 // pred_check_branch
      %12 = sbr.rel (0) target = $region5
    $region4: #{ema_norm.1} parent=1 // pred_region
      _
    $region5: #{ema_norm.1} parent=1 // pred_fallthru
      _
    // Predicated region
    $region6: #{ema_norm.1} parent=1 // pred_check
      _
    $region7: #{ema_norm.1} parent=1 // pred_check_branch
      %14 = sbr.rel (0) target = $region9
    $region8: #{ema_norm.1} parent=1 // pred_region
      _
    $region9: #{ema_norm.1} parent=1 // pred_fallthru
      _
    %v15 = vld [vmem:[%s1] sm:$0xff]
    %v16 = vld [vmem:[%s1 + $0x8] sm:$0xff]
    %v17 = vmul.f32 %v15, %v15
    %v18 = vmul.f32 %v16, %v16
    %v19 = vadd.f32 %v17, %v18
    %20 = vadd.xlane.f32.xlu0 %v19
    %v21 = vpop.xlane.xlu0 %20
    %v22 = vrot.slane %v21, 4
    %v23 = vadd.f32 %v21, %v22
    %v24 = vrot.slane %v23, 2
    %v25 = vadd.f32 %v23, %v24
    %v26 = vrot.slane %v25, 1
    %v27 = vadd.f32 %v25, %v26
    %s28 = vtos %v27
    %v29 = vstv %s28
    %v30 = vmul.f32 %v29, 0.00048828125
    %s31 = sld [smem:[#allocation2]]
    %v32 = vstv %s31
    %v33 = vsub.f32 %v32, %v30
    %v34 = vmul.f32 %v33, 0.99
    %v35 = vadd.f32 %v30, %v34
    %v36 = vrsqrt.pop %v35
    %v37 = vmul.f32 %v36, %v35
    %v38 = vmul.f32 %v37, %v36
    %v39 = vmul.f32 0.5, %v38
    %v40 = vsub.f32 1.5, %v39
    %v41 = vmul.f32 %v36, %v40
    %vm42 = vweird.f32 %v35
    %vm43 = vweird.f32 %v36
    %vm44 = vmor %vm42, %vm43
    %v45 = vsel %vm44, %v36, %v41
    %v46 = vmul.f32 %v15, %v45
    %v47 = vmul.f32 %v16, %v45
    %48 = vst [vmem:[%s2] sm:$0xff] %v46
    %49 = vst [vmem:[%s2 + $0x8] sm:$0xff] %v47
    %vm50 = vcmask 0
    %51 = vst.msk [vmem:[#allocation3] sm:$0x1] %vm50, %v35
    // Predicated region
    $region10: #{ema_norm.1} parent=1 // pred_check
      _
    $region11: #{ema_norm.1} parent=1 // pred_check_branch
      %53 = sbr.rel (0) target = $region13
    $region12: #{ema_norm.1} parent=1 // pred_region
      _
    $region13: #{ema_norm.1} parent=1 // pred_fallthru
      _
    // Predicated region
    $region14: #{ema_norm.1} parent=1 // pred_check
      _
    $region15: #{ema_norm.1} parent=1 // pred_check_branch
      %55 = sbr.rel (0) target = $region17
    $region16: #{ema_norm.1} parent=1 // pred_region
      %57 = vsyncadd [#allocation4], 0
      %s59 = sshll.u32 [#allocation3], 4
      %s60 = int_to_ptr.vmem [resolvable:$true] %s59
      %s61 = sshll.u32 %s3, 4
      %s62 = int_to_ptr.hbm [resolvable:$true] %s61
      %64 = dma.vmem_to_hbm [thread:$0]  %s60, 16, %s62, [#allocation4]
    $region17: #{ema_norm.1} parent=1 // pred_fallthru
      _
    // Predicated region
    $region18: #{ema_norm.1} parent=1 // pred_check
      _
    $region19: #{ema_norm.1} parent=1 // pred_check_branch
      %66 = sbr.rel (0) target = $region21
    $region20: #{ema_norm.1} parent=1 // pred_region
      _
    $region21: #{ema_norm.1} parent=1 // pred_fallthru
      _
    // Predicated region
    $region22: #{ema_norm.1} parent=1 // pred_check
      _
    $region23: #{ema_norm.1} parent=1 // pred_check_branch
      %68 = sbr.rel (0) target = $region25
    $region24: #{ema_norm.1} parent=1 // pred_region
      %70 = dma.done [#allocation4], 16
    $region25: #{ema_norm.1} parent=1 // pred_fallthru
      _
    %71 = vsyncpa [#allocation4], 1

</llo_original>
